<compile_context>
chip_gen: v7x
topology: tpu7x:2x2x1
jax: 0.10.0
libtpu: 0.0.40
codegen_flags: <defaults>
</compile_context>

<pallas_src>
import math
import jax
import jax.numpy as jnp
from jax.experimental import pallas as pl
from jax.experimental.pallas import tpu as pltpu


def _round_up(x, m):
    return ((x + m - 1) // m) * m


def _gelu_new(x):
    # GPT-2 "gelu_new": 0.5*x*(1+tanh(sqrt(2/pi)*(x+0.044715*x^3)))
    c = math.sqrt(2.0 / math.pi)
    return 0.5 * x * (1.0 + jnp.tanh(c * (x + 0.044715 * (x * x * x))))


def gpt2_mlp_kernel(x_ref, wfc_ref, bfc_ref, wproj_ref, bproj_ref, o_ref, acc_ref):
    k = pl.program_id(1)

    @pl.when(k == 0)
    def _init():
        # Fold the c_proj bias into the accumulator initialization.
        acc_ref[...] = jnp.broadcast_to(
            bproj_ref[...].astype(jnp.float32), acc_ref.shape)

    # c_fc slice: [tm, H] @ [H, tk] + [1, tk]   (full reduction over H, f32 acc)
    h = jnp.dot(x_ref[...], wfc_ref[...], preferred_element_type=jnp.float32)
    h = h + bfc_ref[...].astype(jnp.float32)
    # activation (gelu_new) in f32 (elementwise -> commutes with I-tiling)
    a = _gelu_new(h)
    # partial c_proj: [tm, tk] @ [tk, H], accumulated in f32
    acc_ref[...] += jnp.dot(a.astype(wproj_ref.dtype), wproj_ref[...],
                            preferred_element_type=jnp.float32)

    @pl.when(k == pl.num_programs(1) - 1)
    def _finalize():
        # dropout: eval mode -> identity.
        o_ref[...] = acc_ref[...].astype(o_ref.dtype)


def gpt2_mlp(hidden_states, w_fc, b_fc, w_proj, b_proj, *, tm=None, tk=None):
    """Fused GPT2 MLP.  hidden_states: [B, S, H], w_fc: [H, I], w_proj: [I, H]."""
    B, S, H = hidden_states.shape
    Hw, I = w_fc.shape
    assert Hw == H and w_proj.shape == (I, H)
    assert b_fc.shape == (I,) and b_proj.shape == (H,)

    M = B * S
    dtype = hidden_states.dtype
    itemsize = jnp.dtype(dtype).itemsize

    # Row tile: large (MXU-filling), multiple of 8 sublanes; pad M if needed.
    if tm is None:
        tm = min(256, _round_up(M, 8))
    Mp = _round_up(M, tm)

    # Reduction tile over the intermediate dim: multiple of 128 lanes; pad I
    # with zeros if needed (exact: gelu(0) == 0, contributes nothing; padded
    # b_fc entries are zero too).
    if tk is None:
        tk = min(512, _round_up(I, 128))
    Ip = _round_up(I, tk)

    x2d = hidden_states.reshape(M, H)
    if Mp != M:
        x2d = jnp.pad(x2d, ((0, Mp - M), (0, 0)))
    if Ip != I:
        w_fc = jnp.pad(w_fc, ((0, 0), (0, Ip - I)))
        b_fc = jnp.pad(b_fc, ((0, Ip - I),))
        w_proj = jnp.pad(w_proj, ((0, Ip - I), (0, 0)))

    b_fc2 = b_fc.reshape(1, Ip)
    b_proj2 = b_proj.reshape(1, H)

    grid = (Mp // tm, Ip // tk)  # reduction (k) axis last

    # Rough VMEM footprint (double-buffered inputs/outputs + f32 accumulator).
    vmem_bytes = (
        2 * tm * H * itemsize            # x tiles
        + 2 * (H * tk + tk) * itemsize   # w_fc + b_fc tiles
        + 2 * (tk * H + H) * itemsize    # w_proj + b_proj tiles
        + 2 * tm * H * itemsize          # output tiles
        + tm * H * 4                     # f32 accumulator scratch
    )
    vmem_limit = int(min(48 * 1024 * 1024, max(2 * vmem_bytes, 16 * 1024 * 1024)))

    cost = pl.CostEstimate(
        flops=4 * M * H * I,                       # two matmuls
        transcendentals=M * I,                     # one tanh per intermediate elem
        bytes_accessed=(x2d.size + w_fc.size + b_fc.size
                        + w_proj.size + b_proj.size + M * H) * itemsize,
    )

    out = pl.pallas_call(
        gpt2_mlp_kernel,
        out_shape=jax.ShapeDtypeStruct((Mp, H), dtype),
        grid_spec=pltpu.PrefetchScalarGridSpec(
            num_scalar_prefetch=0,
            grid=grid,
            in_specs=[
                pl.BlockSpec((tm, H), lambda i, k: (i, 0)),    # x rows (resident over k)
                pl.BlockSpec((H, tk), lambda i, k: (0, k)),    # c_fc weight slice
                pl.BlockSpec((1, tk), lambda i, k: (0, k)),    # c_fc bias slice
                pl.BlockSpec((tk, H), lambda i, k: (k, 0)),    # c_proj weight slice
                pl.BlockSpec((1, H), lambda i, k: (0, 0)),     # c_proj bias
            ],
            out_specs=pl.BlockSpec((tm, H), lambda i, k: (i, 0)),
            scratch_shapes=[pltpu.VMEM((tm, H), jnp.float32)],  # f32 accumulator
        ),
        compiler_params=pltpu.CompilerParams(
            dimension_semantics=("parallel", "arbitrary"),
            vmem_limit_bytes=vmem_limit,
        ),
        cost_estimate=cost,
    )(x2d, w_fc, b_fc2, w_proj, b_proj2)

    return out[:M].reshape(B, S, H)


def gpt2_mlp_ref(x, w_fc, b_fc, w_proj, b_proj):
    h = jnp.einsum("bsh,hi->bsi", x, w_fc) + b_fc
    a = _gelu_new(h)
    return jnp.einsum("bsi,ih->bsh", a, w_proj) + b_proj


if __name__ == "__main__":
    key = jax.random.PRNGKey(0)

    # --- small GPT2MLP config: batch=2, seq=8, hidden=32, intermediate=4*32 ---
    B, S, H = 2, 8, 32
    I = 4 * H
    k_x, k_wfc, k_wproj, k_rest = jax.random.split(key, 4)

    x = jax.random.normal(k_x, (B, S, H), dtype=jnp.float32)
    # HF Conv1D init: weight ~ N(0, 0.02), bias = 0
    w_fc = 0.02 * jax.random.normal(k_wfc, (H, I), dtype=jnp.float32)
    b_fc = jnp.zeros((I,), dtype=jnp.float32)
    w_proj = 0.02 * jax.random.normal(k_wproj, (I, H), dtype=jnp.float32)
    b_proj = jnp.zeros((H,), dtype=jnp.float32)

    out = gpt2_mlp(x, w_fc, b_fc, w_proj, b_proj)
    out = jax.block_until_ready(out)
    ref = gpt2_mlp_ref(x, w_fc, b_fc, w_proj, b_proj)
    assert out.shape == (B, S, H)
    assert jnp.allclose(out, ref, atol=1e-5, rtol=1e-5)

    # --- second check: exercises multi-tile rows + the I-reduction grid axis
    #     (accumulator init with folded bias / finalize writeback) ---
    B2, S2, H2 = 2, 128, 128
    I2 = 4 * H2
    k_x2, k_wfc2, k_bfc2, k_wproj2, k_bproj2 = jax.random.split(k_rest, 5)
    x2 = jax.random.normal(k_x2, (B2, S2, H2), dtype=jnp.float32)
    w_fc2 = 0.02 * jax.random.normal(k_wfc2, (H2, I2), dtype=jnp.float32)
    b_fc2 = 0.02 * jax.random.normal(k_bfc2, (I2,), dtype=jnp.float32)
    w_proj2 = 0.02 * jax.random.normal(k_wproj2, (I2, H2), dtype=jnp.float32)
    b_proj2 = 0.02 * jax.random.normal(k_bproj2, (H2,), dtype=jnp.float32)

    out2 = gpt2_mlp(x2, w_fc2, b_fc2, w_proj2, b_proj2, tm=64, tk=128)
    out2 = jax.block_until_ready(out2)
    ref2 = gpt2_mlp_ref(x2, w_fc2, b_fc2, w_proj2, b_proj2)
    assert jnp.allclose(out2, ref2, atol=1e-4, rtol=1e-4)

    print("KERNEL_OK")
</pallas_src>

<mosaic_0001>
module attributes {stable_mosaic.version = 11 : i64} {
  func.func @gpt2_mlp_kernel(%arg0: i32, %arg1: i32, %arg2: memref<16x32xf32, #tpu.memory_space<vmem>>, %arg3: memref<32x128xf32, #tpu.memory_space<vmem>>, %arg4: memref<1x128xf32, #tpu.memory_space<vmem>>, %arg5: memref<128x32xf32, #tpu.memory_space<vmem>>, %arg6: memref<1x32xf32, #tpu.memory_space<vmem>>, %arg7: memref<16x32xf32, #tpu.memory_space<vmem>>, %arg8: memref<16x32xf32, #tpu.memory_space<vmem>>) attributes {dimension_semantics = [#tpu.dimension_semantics<parallel>, #tpu.dimension_semantics<arbitrary>], iteration_bounds = array<i64: 1, 1>, scalar_prefetch = 0 : i64, scratch_operands = 1 : i64, tpu.core_type = #tpu.core_type<tc>, window_params = [{transform_indices = @transform_0, window_bounds = array<i64: 16, 32>}, {transform_indices = @transform_1, window_bounds = array<i64: 32, 128>}, {transform_indices = @transform_2, window_bounds = array<i64: 1, 128>}, {transform_indices = @transform_3, window_bounds = array<i64: 128, 32>}, {pipeline_mode = #tpu.pipeline_mode<synchronous>, transform_indices = @transform_4, window_bounds = array<i64: 1, 32>}, {transform_indices = @transform_5, window_bounds = array<i64: 16, 32>}]} {
    %c0_i32 = arith.constant 0 : i32
    %0 = arith.cmpi eq, %arg1, %c0_i32 : i32
    %1 = arith.extui %0 : i1 to i32
    %c0_i32_0 = arith.constant 0 : i32
    %2 = arith.cmpi ne, %1, %c0_i32_0 : i32
    scf.if %2 {
      %c0_19 = arith.constant 0 : index
      %c0_20 = arith.constant 0 : index
      %30 = vector.load %arg6[%c0_19, %c0_20] : memref<1x32xf32, #tpu.memory_space<vmem>>, vector<1x32xf32>
      %31 = vector.shape_cast %30 : vector<1x32xf32> to vector<1x32xf32>
      %32 = vector.broadcast %31 : vector<1x32xf32> to vector<16x32xf32>
      %c0_21 = arith.constant 0 : index
      %c0_22 = arith.constant 0 : index
      %33 = vector.load %arg8[%c0_21, %c0_22] : memref<16x32xf32, #tpu.memory_space<vmem>>, vector<16x32xf32>
      tpu.vector_store %arg8[%c0_21, %c0_22], %32 {strides = array<i32>} : memref<16x32xf32, #tpu.memory_space<vmem>>, vector<16x32xf32>,
    } else {
    }
    %c0 = arith.constant 0 : index
    %c0_1 = arith.constant 0 : index
    %3 = vector.load %arg2[%c0, %c0_1] : memref<16x32xf32, #tpu.memory_space<vmem>>, vector<16x32xf32>
    %c0_2 = arith.constant 0 : index
    %c0_3 = arith.constant 0 : index
    %4 = vector.load %arg3[%c0_2, %c0_3] : memref<32x128xf32, #tpu.memory_space<vmem>>, vector<32x128xf32>
    %cst = arith.constant dense<0.000000e+00> : vector<16x128xf32>
    %5 = tpu.matmul %3, %4, %cst {dimension_numbers = #tpu.dot_dimension_numbers<[1], [0], [0], [1], [0, 0, 1, 1], [], []>} : vector<16x32xf32>, vector<32x128xf32>, vector<16x128xf32> -> vector<16x128xf32>
    %c0_4 = arith.constant 0 : index
    %c0_5 = arith.constant 0 : index
    %6 = vector.load %arg4[%c0_4, %c0_5] : memref<1x128xf32, #tpu.memory_space<vmem>>, vector<1x128xf32>
    %7 = vector.broadcast %6 : vector<1x128xf32> to vector<16x128xf32>
    %8 = arith.addf %5, %7 : vector<16x128xf32>
    %cst_6 = arith.constant 5.000000e-01 : f32
    %9 = vector.broadcast %cst_6 : f32 to vector<16x128xf32>
    %10 = arith.mulf %9, %8 : vector<16x128xf32>
    %11 = arith.mulf %8, %8 : vector<16x128xf32>
    %12 = arith.mulf %11, %8 : vector<16x128xf32>
    %cst_7 = arith.constant 4.471500e-02 : f32
    %13 = vector.broadcast %cst_7 : f32 to vector<16x128xf32>
    %14 = arith.mulf %13, %12 : vector<16x128xf32>
    %15 = arith.addf %8, %14 : vector<16x128xf32>
    %cst_8 = arith.constant 0.797884583 : f32
    %16 = vector.broadcast %cst_8 : f32 to vector<16x128xf32>
    %17 = arith.mulf %16, %15 : vector<16x128xf32>
    %18 = math.tanh %17 : vector<16x128xf32>
    %cst_9 = arith.constant 1.000000e+00 : f32
    %19 = vector.broadcast %cst_9 : f32 to vector<16x128xf32>
    %20 = arith.addf %19, %18 : vector<16x128xf32>
    %21 = arith.mulf %10, %20 : vector<16x128xf32>
    %c0_10 = arith.constant 0 : index
    %c0_11 = arith.constant 0 : index
    %22 = vector.load %arg8[%c0_10, %c0_11] : memref<16x32xf32, #tpu.memory_space<vmem>>, vector<16x32xf32>
    %c0_12 = arith.constant 0 : index
    %c0_13 = arith.constant 0 : index
    %23 = vector.load %arg5[%c0_12, %c0_13] : memref<128x32xf32, #tpu.memory_space<vmem>>, vector<128x32xf32>
    %cst_14 = arith.constant dense<0.000000e+00> : vector<16x32xf32>
    %24 = tpu.matmul %21, %23, %cst_14 {dimension_numbers = #tpu.dot_dimension_numbers<[1], [0], [0], [1], [0, 0, 1, 1], [], []>} : vector<16x128xf32>, vector<128x32xf32>, vector<16x32xf32> -> vector<16x32xf32>
    %25 = arith.addf %22, %24 : vector<16x32xf32>
    %c0_15 = arith.constant 0 : index
    %c0_16 = arith.constant 0 : index
    %26 = vector.load %arg8[%c0_15, %c0_16] : memref<16x32xf32, #tpu.memory_space<vmem>>, vector<16x32xf32>
    tpu.vector_store %arg8[%c0_15, %c0_16], %25 {strides = array<i32>} : memref<16x32xf32, #tpu.memory_space<vmem>>, vector<16x32xf32>,
    %c0_i32_17 = arith.constant 0 : i32
    %27 = arith.cmpi eq, %arg1, %c0_i32_17 : i32
    %28 = arith.extui %27 : i1 to i32
    %c0_i32_18 = arith.constant 0 : i32
    %29 = arith.cmpi ne, %28, %c0_i32_18 : i32
    scf.if %29 {
      %c0_19 = arith.constant 0 : index
      %c0_20 = arith.constant 0 : index
      %30 = vector.load %arg8[%c0_19, %c0_20] : memref<16x32xf32, #tpu.memory_space<vmem>>, vector<16x32xf32>
      %c0_21 = arith.constant 0 : index
      %c0_22 = arith.constant 0 : index
      %31 = vector.load %arg7[%c0_21, %c0_22] : memref<16x32xf32, #tpu.memory_space<vmem>>, vector<16x32xf32>
      tpu.vector_store %arg7[%c0_21, %c0_22], %30 {strides = array<i32>} : memref<16x32xf32, #tpu.memory_space<vmem>>, vector<16x32xf32>,
    } else {
    }
    return
  }
  func.func @transform_0(%arg0: i32, %arg1: i32) -> (i32, i32) {
    %c0_i32 = arith.constant 0 : i32
    %c0_i32_0 = arith.constant 0 : i32
    return %arg0, %c0_i32 : i32, i32
  }
  func.func @transform_1(%arg0: i32, %arg1: i32) -> (i32, i32) {
    %c0_i32 = arith.constant 0 : i32
    %c0_i32_0 = arith.constant 0 : i32
    return %c0_i32, %arg1 : i32, i32
  }
  func.func @transform_2(%arg0: i32, %arg1: i32) -> (i32, i32) {
    %c0_i32 = arith.constant 0 : i32
    %c0_i32_0 = arith.constant 0 : i32
    return %c0_i32, %arg1 : i32, i32
  }
  func.func @transform_3(%arg0: i32, %arg1: i32) -> (i32, i32) {
    %c0_i32 = arith.constant 0 : i32
    %c0_i32_0 = arith.constant 0 : i32
    return %arg1, %c0_i32 : i32, i32
  }
  func.func @transform_4(%arg0: i32, %arg1: i32) -> (i32, i32) {
    %c0_i32 = arith.constant 0 : i32
    %c0_i32_0 = arith.constant 0 : i32
    %c0_i32_1 = arith.constant 0 : i32
    return %c0_i32, %c0_i32_0 : i32, i32
  }
  func.func @transform_5(%arg0: i32, %arg1: i32) -> (i32, i32) {
    %c0_i32 = arith.constant 0 : i32
    %c0_i32_0 = arith.constant 0 : i32
    return %arg0, %c0_i32 : i32, i32
  }
}

</mosaic_0001>

<llo_original>
// kernel: tpu_custom_call.1
$region0: #{tpu_custom_call.1}
  #allocation0 [shape = 'u32[]', space=smem, size = 0x4, offset = 0x4, fixed_abs, tag = 'smem constant byte address 0x4 - core index']
  #allocation1 [shape = 'u32[144,128]{1,0:T(1,128)}', space=vmem, size = 0x12000, scoped, tag = 'internal scratch']
  #allocation2 [shape = 'f32[16,32]{1,0:T(8,128)}', space=vmem, size = 0x2000, scoped, tag = 'scratch operand']
  %s0 = inlined_call_operand.vmem [shape: f32[16,32], index: 0, kind: input, shape index: {}]
  %s1 = inlined_call_operand.vmem [shape: f32[32,128], index: 1, kind: input, shape index: {}]
  %s2 = inlined_call_operand.vmem [shape: f32[1,128], index: 2, kind: input, shape index: {}]
  %s3 = inlined_call_operand.vmem [shape: f32[128,32], index: 3, kind: input, shape index: {}]
  %s4 = inlined_call_operand.vmem [shape: f32[1,32], index: 4, kind: input, shape index: {}]
  %s5 = inlined_call_operand.hbm [shape: f32[16,32], index: 5, kind: output, shape index: {}]
  %s6 = sld [smem:[#allocation0]]
  $region38: #{tpu_custom_call.1} parent=0
    _
  %s8 = ssub.s32 1, %s6
  %s9 = scalar_select 0, %s8, %s6
  $region1: #{tpu_custom_call.1} parent=0
    #allocation3 [shape = 'u8[8192]{0}', space=vmem, size = 0x2000, scoped, tag = 'output window, operand 0, single buffered']
    #allocation4 [shape = 's32[1]{0}', space=sflag, size = 0x4, scoped, tag = 'scoped memory for tpu_custom_call.1']
    %10 = vsyncpa [#allocation4], 0
    // Predicated region
    $region2: #{tpu_custom_call.1} parent=1 // pred_check
      _
    $region3: #{tpu_custom_call.1} parent=1 // pred_check_branch
      %12 = sbr.rel (0) target = $region5
    $region4: #{tpu_custom_call.1} parent=1 // pred_region
      _
    $region5: #{tpu_custom_call.1} parent=1 // pred_fallthru
      _
    // Predicated region
    $region6: #{tpu_custom_call.1} parent=1 // pred_check
      _
    $region7: #{tpu_custom_call.1} parent=1 // pred_check_branch
      %14 = sbr.rel (0) target = $region9
    $region8: #{tpu_custom_call.1} parent=1 // pred_region
      _
    $region9: #{tpu_custom_call.1} parent=1 // pred_fallthru
      _
    // Predicated region
    $region10: #{tpu_custom_call.1} parent=1 // pred_check
      _
    $region11: #{tpu_custom_call.1} parent=1 // pred_check_branch
      %16 = sbr.rel (0) target = $region13
    $region12: #{tpu_custom_call.1} parent=1 // pred_region
      _
    $region13: #{tpu_custom_call.1} parent=1 // pred_fallthru
      _
    // Predicated region
    $region14: #{tpu_custom_call.1} parent=1 // pred_check
      _
    $region15: #{tpu_custom_call.1} parent=1 // pred_check_branch
      %18 = sbr.rel (0) target = $region17
    $region16: #{tpu_custom_call.1} parent=1 // pred_region
      _
    $region17: #{tpu_custom_call.1} parent=1 // pred_fallthru
      _
    // Predicated region
    $region18: #{tpu_custom_call.1} parent=1 // pred_check
      _
    $region19: #{tpu_custom_call.1} parent=1 // pred_check_branch
      %20 = sbr.rel (0) target = $region21
    $region20: #{tpu_custom_call.1} parent=1 // pred_region
      _
    $region21: #{tpu_custom_call.1} parent=1 // pred_fallthru
      _
    %p21 = scmp.eq.s32.totalorder 0, 0
    // Predicated region
    $region22: #{tpu_custom_call.1} parent=1 // pred_check
      %p22 = pneg %p21
    $region23: #{tpu_custom_call.1} parent=1 // pred_check_branch
      %24 = sbr.rel (%p22) target = $region25
    $region24: #{tpu_custom_call.1} parent=1 // pred_region
      %v25 = vld [vmem:[%s4] sm:$0x1]
      %v27 = vlaneseq
      %v28 = vshrl.u32 %v27, 7
      %v29 = vsub.s32 0, %v28
      %v30 = vrot.slane %v25, %v29
      %vm32 = vcmask 261120
      %33 = vst.msk [vmem:[#allocation2] sm:$0xff] %vm32, %v30
      %34 = vst.msk [vmem:[#allocation2 + $0x8] sm:$0xff] %vm32, %v30
    $region25: #{tpu_custom_call.1} parent=1 // pred_fallthru
      _
    %v35 = vld [vmem:[%s0] sm:$0xff]
    %v36 = vld [vmem:[%s0 + $0x8] sm:$0xff]
    %v37 = vld [vmem:[%s1] sm:$0xff]
    %v38 = vld [vmem:[%s1 + $0x8] sm:$0xff]
    %v39 = vld [vmem:[%s1 + $0x10] sm:$0xff]
    %v40 = vld [vmem:[%s1 + $0x18] sm:$0xff]
    %v41 = vld [vmem:[%s2] sm:$0x1]
    %v43 = vlaneseq
    %v44 = vshrl.u32 %v43, 7
    %v45 = vsub.s32 0, %v44
    %v46 = vrot.slane %v41, %v45
    %vm48 = vcmask 261120
    %v50 = vsel %vm48, %v35, 0
    %v53 = vsel %vm48, %v36, 0
    %55 = vmatprep.subr.mxu0 0.0
    %56 = vmatpush1.msra.mxu0 %v37
    %57 = vmatprep.subr.mxu0 0.0
    %58 = vmatpush1.msra.mxu0 %v38
    %59 = vmatprep.subr.mxu0 0.0
    %60 = vmatpush1.msra.mxu0 %v39
    %61 = vmatprep.subr.mxu0 0.0
    %62 = vmatpush1.msra.mxu0 %v40
    %63 = vmatprep.subr.mxu0 0.0
    %64 = vmatpush1.msra.mxu0 0.0
    %65 = vmatprep.subr.mxu0 0.0
    %66 = vmatpush1.msra.mxu0 0.0
    %67 = vmatprep.subr.mxu0 0.0
    %68 = vmatpush1.msra.mxu0 0.0
    %69 = vmatprep.subr.mxu0 0.0
    %70 = vmatpush1.msra.mxu0 0.0
    %71 = vmatprep.subr.mxu0 0.0
    %72 = vmatpush1.msra.mxu0 0.0
    %73 = vmatprep.subr.mxu0 0.0
    %74 = vmatpush1.msra.mxu0 0.0
    %75 = vmatprep.subr.mxu0 0.0
    %76 = vmatpush1.msra.mxu0 0.0
    %77 = vmatprep.subr.mxu0 0.0
    %78 = vmatpush1.msra.mxu0 0.0
    %79 = vmatprep.subr.mxu0 0.0
    %80 = vmatpush1.msra.mxu0 0.0
    %81 = vmatprep.subr.mxu0 0.0
    %82 = vmatpush1.msra.mxu0 0.0
    %83 = vmatprep.subr.mxu0 0.0
    %84 = vmatpush1.msra.mxu0 0.0
    %85 = vmatprep.subr.mxu0 0.0
    %86 = vmatpush1.msra.mxu0 0.0
    %87 = vmatprep.subr.mxu0 0.0
    %88 = vmatpush1.msra.mxu0 0.0
    %89 = vmatprep.subr.mxu0 0.0
    %90 = vmatpush1.msra.mxu0 0.0
    %91 = vmatprep.subr.mxu0 0.0
    %92 = vmatpush1.msra.mxu0 0.0
    %93 = vmatprep.subr.mxu0 0.0
    %94 = vmatpush1.msra.mxu0 0.0
    %95 = vmatprep.subr.mxu0 0.0
    %96 = vmatpush1.msra.mxu0 0.0
    %97 = vmatprep.subr.mxu0 0.0
    %98 = vmatpush1.msra.mxu0 0.0
    %99 = vmatprep.subr.mxu0 0.0
    %100 = vmatpush1.msra.mxu0 0.0
    %101 = vmatprep.subr.mxu0 0.0
    %102 = vmatpush1.msra.mxu0 0.0
    %103 = vmatprep.subr.mxu0 0.0
    %104 = vmatpush1.msra.mxu0 0.0
    %105 = vmatprep.subr.mxu0 0.0
    %106 = vmatpush1.msra.mxu0 0.0
    %107 = vmatprep.subr.mxu0 0.0
    %108 = vmatpush1.msra.mxu0 0.0
    %109 = vmatprep.subr.mxu0 0.0
    %110 = vmatpush1.msra.mxu0 0.0
    %111 = vmatprep.subr.mxu0 0.0
    %112 = vmatpush1.msra.mxu0 0.0
    %113 = vmatprep.subr.mxu0 0.0
    %114 = vmatpush1.msra.mxu0 0.0
    %115 = vmatprep.subr.mxu0 0.0
    %116 = vmatpush1.msra.mxu0 0.0
    %117 = vmatprep.subr.mxu0 0.0
    %118 = vmatpush1.msra.mxu0 0.0
    %119 = vmatprep.mubr.f32.mxu0 0.0
    %120 = vmatmul.mubr.f32.gmra.mrb[0].mxu0 %v50
    %v121 = vpop.f32.mrb[0].mxu0
    %v122 = vadd.f32 %v46, %v121
    %v123 = vpop.f32.mrb[0].mxu0
    %124 = vmatprep.mubr.f32.mxu0 0.0
    %125 = vmatmul.mubr.f32.gmra.mrb[0].mxu0 %v53
    %v126 = vpop.f32.mrb[0].mxu0
    %v127 = vadd.f32 %v46, %v126
    %v128 = vpop.f32.mrb[0].mxu0
    %129 = vdwg.mxu0
    %v130 = vmul.f32 %v122, 0.5
    %v131 = vmul.f32 %v127, 0.5
    %v132 = vmul.f32 %v122, %v122
    %v133 = vmul.f32 %v127, %v127
    %v134 = vmul.f32 %v132, %v122
    %v135 = vmul.f32 %v133, %v127
    %v136 = vmul.f32 %v134, 0.044715
    %v137 = vmul.f32 %v135, 0.044715
    %v138 = vadd.f32 %v122, %v136
    %v139 = vadd.f32 %v127, %v137
    %v140 = vmul.f32 %v138, 0.7978846
    %v141 = vmul.f32 %v139, 0.7978846
    %v142 = vtanh.pop %v140
    %v143 = vtanh.pop %v141
    %v144 = vadd.f32 %v142, 1.0
    %v145 = vadd.f32 %v143, 1.0
    %v146 = vmul.f32 %v130, %v144
    %v147 = vmul.f32 %v131, %v145
    %v148 = vld [vmem:[#allocation2] sm:$0xff]
    %v149 = vld [vmem:[#allocation2 + $0x8] sm:$0xff]
    %v150 = vld [vmem:[%s3] sm:$0xff]
    %v151 = vld [vmem:[%s3 + $0x8] sm:$0xff]
    %v152 = vld [vmem:[%s3 + $0x10] sm:$0xff]
    %v153 = vld [vmem:[%s3 + $0x18] sm:$0xff]
    %v154 = vld [vmem:[%s3 + $0x20] sm:$0xff]
    %v155 = vld [vmem:[%s3 + $0x28] sm:$0xff]
    %v156 = vld [vmem:[%s3 + $0x30] sm:$0xff]
    %v157 = vld [vmem:[%s3 + $0x38] sm:$0xff]
    %v158 = vld [vmem:[%s3 + $0x40] sm:$0xff]
    %v159 = vld [vmem:[%s3 + $0x48] sm:$0xff]
    %v160 = vld [vmem:[%s3 + $0x50] sm:$0xff]
    %v161 = vld [vmem:[%s3 + $0x58] sm:$0xff]
    %v162 = vld [vmem:[%s3 + $0x60] sm:$0xff]
    %v163 = vld [vmem:[%s3 + $0x68] sm:$0xff]
    %v164 = vld [vmem:[%s3 + $0x70] sm:$0xff]
    %v165 = vld [vmem:[%s3 + $0x78] sm:$0xff]
    %166 = vmatprep.subr.mxu0 0.0
    %167 = vmatpush1.msra.mxu0 %v150
    %168 = vmatprep.subr.mxu0 0.0
    %169 = vmatpush1.msra.mxu0 %v151
    %170 = vmatprep.subr.mxu0 0.0
    %171 = vmatpush1.msra.mxu0 %v152
    %172 = vmatprep.subr.mxu0 0.0
    %173 = vmatpush1.msra.mxu0 %v153
    %174 = vmatprep.subr.mxu0 0.0
    %175 = vmatpush1.msra.mxu0 %v154
    %176 = vmatprep.subr.mxu0 0.0
    %177 = vmatpush1.msra.mxu0 %v155
    %178 = vmatprep.subr.mxu0 0.0
    %179 = vmatpush1.msra.mxu0 %v156
    %180 = vmatprep.subr.mxu0 0.0
    %181 = vmatpush1.msra.mxu0 %v157
    %182 = vmatprep.subr.mxu0 0.0
    %183 = vmatpush1.msra.mxu0 %v158
    %184 = vmatprep.subr.mxu0 0.0
    %185 = vmatpush1.msra.mxu0 %v159
    %186 = vmatprep.subr.mxu0 0.0
    %187 = vmatpush1.msra.mxu0 %v160
    %188 = vmatprep.subr.mxu0 0.0
    %189 = vmatpush1.msra.mxu0 %v161
    %190 = vmatprep.subr.mxu0 0.0
    %191 = vmatpush1.msra.mxu0 %v162
    %192 = vmatprep.subr.mxu0 0.0
    %193 = vmatpush1.msra.mxu0 %v163
    %194 = vmatprep.subr.mxu0 0.0
    %195 = vmatpush1.msra.mxu0 %v164
    %196 = vmatprep.subr.mxu0 0.0
    %197 = vmatpush1.msra.mxu0 %v165
    %198 = vmatprep.subr.mxu0 0.0
    %199 = vmatpush1.msra.mxu0 0.0
    %200 = vmatprep.subr.mxu0 0.0
    %201 = vmatpush1.msra.mxu0 0.0
    %202 = vmatprep.subr.mxu0 0.0
    %203 = vmatpush1.msra.mxu0 0.0
    %204 = vmatprep.subr.mxu0 0.0
    %205 = vmatpush1.msra.mxu0 0.0
    %206 = vmatprep.subr.mxu0 0.0
    %207 = vmatpush1.msra.mxu0 0.0
    %208 = vmatprep.subr.mxu0 0.0
    %209 = vmatpush1.msra.mxu0 0.0
    %210 = vmatprep.subr.mxu0 0.0
    %211 = vmatpush1.msra.mxu0 0.0
    %212 = vmatprep.subr.mxu0 0.0
    %213 = vmatpush1.msra.mxu0 0.0
    %214 = vmatprep.subr.mxu0 0.0
    %215 = vmatpush1.msra.mxu0 0.0
    %216 = vmatprep.subr.mxu0 0.0
    %217 = vmatpush1.msra.mxu0 0.0
    %218 = vmatprep.subr.mxu0 0.0
    %219 = vmatpush1.msra.mxu0 0.0
    %220 = vmatprep.subr.mxu0 0.0
    %221 = vmatpush1.msra.mxu0 0.0
    %222 = vmatprep.subr.mxu0 0.0
    %223 = vmatpush1.msra.mxu0 0.0
    %224 = vmatprep.subr.mxu0 0.0
    %225 = vmatpush1.msra.mxu0 0.0
    %226 = vmatprep.subr.mxu0 0.0
    %227 = vmatpush1.msra.mxu0 0.0
    %228 = vmatprep.subr.mxu0 0.0
    %229 = vmatpush1.msra.mxu0 0.0
    %230 = vmatprep.mubr.f32.mxu0 0.0
    %231 = vmatmul.mubr.f32.gmra.mrb[0].mxu0 %v146
    %v232 = vpop.f32.mrb[0].mxu0
    %v233 = vadd.f32 0.0, %v232
    %v234 = vpop.f32.mrb[0].mxu0
    %235 = vmatprep.mubr.f32.mxu0 0.0
    %236 = vmatmul.mubr.f32.gmra.mrb[0].mxu0 %v147
    %v237 = vpop.f32.mrb[0].mxu0
    %v238 = vadd.f32 0.0, %v237
    %v239 = vpop.f32.mrb[0].mxu0
    %240 = vdwg.mxu0
    %v241 = vadd.f32 %v148, %v233
    %v242 = vadd.f32 %v149, %v238
    %243 = vst.msk [vmem:[#allocation2] sm:$0xff] %vm48, %v241
    %244 = vst.msk [vmem:[#allocation2 + $0x8] sm:$0xff] %vm48, %v242
    // Predicated region
    $region26: #{tpu_custom_call.1} parent=1 // pred_check
      %p245 = pneg %p21
    $region27: #{tpu_custom_call.1} parent=1 // pred_check_branch
      %247 = sbr.rel (%p245) target = $region29
    $region28: #{tpu_custom_call.1} parent=1 // pred_region
      %v248 = vld [vmem:[#allocation2] sm:$0xff]
      %v249 = vld [vmem:[#allocation2 + $0x8] sm:$0xff]
      %250 = vst.msk [vmem:[#allocation3] sm:$0xff] %vm48, %v248
      %251 = vst.msk [vmem:[#allocation3 + $0x8] sm:$0xff] %vm48, %v249
    $region29: #{tpu_custom_call.1} parent=1 // pred_fallthru
      _
    // Predicated region
    $region30: #{tpu_custom_call.1} parent=1 // pred_check
      _
    $region31: #{tpu_custom_call.1} parent=1 // pred_check_branch
      %253 = sbr.rel (0) target = $region33
    $region32: #{tpu_custom_call.1} parent=1 // pred_region
      %s255 = ssub.s32 256, 256
      %256 = vsyncadd [#allocation4], %s255
      %s257 = sshll.u32 [#allocation3], 4
      %s258 = int_to_ptr.vmem [resolvable:$true] %s257
      %263 = dma.vmem_to_hbm [thread:$0]  %s258, 256, %s5, [#allocation4], 128, 128, 8
    $region33: #{tpu_custom_call.1} parent=1 // pred_fallthru
      _
    // Predicated region
    $region34: #{tpu_custom_call.1} parent=1 // pred_check
      _
    $region35: #{tpu_custom_call.1} parent=1 // pred_check_branch
      %265 = sbr.rel (0) target = $region37
    $region36: #{tpu_custom_call.1} parent=1 // pred_region
      %266 = dma.done [#allocation4], 256
    $region37: #{tpu_custom_call.1} parent=1 // pred_fallthru
      _
    %267 = vsyncpa [#allocation4], 1

</llo_original>
